<compile_context>
chip_gen: v7x
topology: tpu7x:2x2x1
jax: 0.10.0
libtpu: 0.0.40
codegen_flags: <defaults>
</compile_context>

<pallas_src>
import functools

import jax
import jax.numpy as jnp
from jax.experimental import pallas as pl
from jax.experimental.pallas import tpu as pltpu


_NEG_INF = -1e30  # finite mask value: avoids inf-inf NaNs in the online softmax


def _round_up(x, m):
    return ((x + m - 1) // m) * m


def _seq_tile(n, max_tile):
    """Largest tile <= max_tile that divides n and is sublane (8) aligned."""
    if n <= max_tile:
        return n
    for t in range(max_tile, 7, -1):
        if n % t == 0 and t % 8 == 0:
            return t
    return n


def _head_group(h, max_group):
    """Largest divisor of h that is <= max_group (heads per grid step)."""
    for g in range(min(h, max_group), 0, -1):
        if h % g == 0:
            return g
    return 1


# --------------------------------------------------------------------------- #
# Pass 1: LayerNorm + fused QKV projection (lane-dense)
# --------------------------------------------------------------------------- #
def _ln_qkv_kernel(x_ref, gamma_ref, beta_ref, w_ref, o_ref, *, eps):
    x = x_ref[...].astype(jnp.float32)                       # (tr, D)
    mean = jnp.mean(x, axis=-1, keepdims=True)
    var = jnp.mean(jnp.square(x - mean), axis=-1, keepdims=True)
    xn = (x - mean) * jax.lax.rsqrt(var + eps)
    xn = xn * gamma_ref[...].astype(jnp.float32) + beta_ref[...].astype(jnp.float32)
    # Full-lane-width matmul: output 3*inner lanes, contraction depth D.
    y = jnp.dot(xn.astype(w_ref.dtype), w_ref[...],
                preferred_element_type=jnp.float32)           # (tr, 3*inner)
    o_ref[...] = y.astype(o_ref.dtype)


def _ln_qkv(x_rows, gamma2, beta2, w_qkv, *, eps, out_dtype, row_tile, vmem_limit):
    r, d = x_rows.shape
    three_inner = w_qkv.shape[1]
    tr = _seq_tile(r, row_tile)
    return pl.pallas_call(
        functools.partial(_ln_qkv_kernel, eps=eps),
        out_shape=jax.ShapeDtypeStruct((r, three_inner), out_dtype),
        grid=(r // tr,),
        in_specs=[
            pl.BlockSpec((tr, d), lambda i: (i, 0)),
            pl.BlockSpec((1, d), lambda i: (0, 0)),
            pl.BlockSpec((1, d), lambda i: (0, 0)),
            pl.BlockSpec((d, three_inner), lambda i: (0, 0)),   # constant block
        ],
        out_specs=pl.BlockSpec((tr, three_inner), lambda i: (i, 0)),
        compiler_params=pltpu.CompilerParams(
            dimension_semantics=("parallel",),
            vmem_limit_bytes=vmem_limit),
    )(x_rows, gamma2, beta2, w_qkv)


# --------------------------------------------------------------------------- #
# Pass 2: flash attention over pre-projected q/k/v (heads grouped per grid step)
# --------------------------------------------------------------------------- #
def _flash_attn_kernel(q_ref, k_ref, v_ref, o_ref, m_s, l_s, acc_s,
                       *, kv_tile, n_valid, need_mask):
    ki = pl.program_id(3)
    nk = pl.num_programs(3)

    @pl.when(ki == 0)
    def _init():
        m_s[...] = jnp.full(m_s.shape, -jnp.inf, m_s.dtype)
        l_s[...] = jnp.zeros(l_s.shape, l_s.dtype)
        acc_s[...] = jnp.zeros(acc_s.shape, acc_s.dtype)

    q = q_ref[0]                                              # (gh, tq, dh), scale pre-folded
    k = k_ref[0]                                              # (gh, tk, dh)
    v = v_ref[0]                                              # (gh, tk, dh)

    s = jnp.einsum('hqd,hkd->hqk', q, k,
                   preferred_element_type=jnp.float32)        # (gh, tq, tk) f32
    if need_mask:
        kpos = ki * kv_tile + jax.lax.broadcasted_iota(jnp.int32, s.shape, 2)
        s = jnp.where(kpos < n_valid, s, _NEG_INF)

    m_prev = m_s[...]
    m_new = jnp.maximum(m_prev, jnp.max(s, axis=-1, keepdims=True))
    alpha = jnp.exp(m_prev - m_new)
    p = jnp.exp(s - m_new)                                    # f32 softmax numerics
    l_s[...] = alpha * l_s[...] + jnp.sum(p, axis=-1, keepdims=True)
    acc_s[...] = alpha * acc_s[...] + jnp.einsum(
        'hqk,hkd->hqd', p.astype(v.dtype), v,
        preferred_element_type=jnp.float32)
    m_s[...] = m_new

    @pl.when(ki == nk - 1)
    def _finalize():
        # approx reciprocal (EUP slot); fine for inference. Use approx=False for training.
        o_ref[0] = (acc_s[...] * pl.reciprocal(l_s[...], approx=True)).astype(o_ref.dtype)


def _flash_attention(q, k, v, *, n_valid, q_tile, kv_tile, head_group, vmem_limit):
    b, h, n_pad, dh = q.shape
    tq = _seq_tile(n_pad, q_tile)
    tk = _seq_tile(n_pad, kv_tile)
    gh = _head_group(h, head_group)
    need_mask = n_pad != n_valid

    kernel = functools.partial(_flash_attn_kernel, kv_tile=tk,
                               n_valid=n_valid, need_mask=need_mask)
    return pl.pallas_call(
        kernel,
        out_shape=jax.ShapeDtypeStruct((b, h, n_pad, dh), q.dtype),
        grid=(b, h // gh, n_pad // tq, n_pad // tk),
        in_specs=[
            pl.BlockSpec((1, gh, tq, dh), lambda bi, g, qi, ki: (bi, g, qi, 0)),
            pl.BlockSpec((1, gh, tk, dh), lambda bi, g, qi, ki: (bi, g, ki, 0)),
            pl.BlockSpec((1, gh, tk, dh), lambda bi, g, qi, ki: (bi, g, ki, 0)),
        ],
        out_specs=pl.BlockSpec((1, gh, tq, dh), lambda bi, g, qi, ki: (bi, g, qi, 0)),
        scratch_shapes=[
            pltpu.VMEM((gh, tq, 1), jnp.float32),    # running max
            pltpu.VMEM((gh, tq, 1), jnp.float32),    # running denominator
            pltpu.VMEM((gh, tq, dh), jnp.float32),   # running numerator
        ],
        compiler_params=pltpu.CompilerParams(
            dimension_semantics=("parallel", "parallel", "parallel", "arbitrary"),
            vmem_limit_bytes=vmem_limit),
    )(q, k, v)


# --------------------------------------------------------------------------- #
# Pass 3: output projection (lane-dense, head reduction inside the MXU contraction)
# --------------------------------------------------------------------------- #
def _out_proj_kernel(x_ref, w_ref, b_ref, o_ref):
    y = jnp.dot(x_ref[...], w_ref[...], preferred_element_type=jnp.float32)
    o_ref[...] = (y + b_ref[...].astype(jnp.float32)).astype(o_ref.dtype)


def _out_proj(x_rows, w_out, b_out2, *, out_dtype, row_tile, vmem_limit):
    r, inner = x_rows.shape
    d = w_out.shape[1]
    tr = _seq_tile(r, row_tile)
    return pl.pallas_call(
        _out_proj_kernel,
        out_shape=jax.ShapeDtypeStruct((r, d), out_dtype),
        grid=(r // tr,),
        in_specs=[
            pl.BlockSpec((tr, inner), lambda i: (i, 0)),
            pl.BlockSpec((inner, d), lambda i: (0, 0)),         # constant block
            pl.BlockSpec((1, d), lambda i: (0, 0)),
        ],
        out_specs=pl.BlockSpec((tr, d), lambda i: (i, 0)),
        compiler_params=pltpu.CompilerParams(
            dimension_semantics=("parallel",),
            vmem_limit_bytes=vmem_limit),
    )(x_rows, w_out, b_out2)


# --------------------------------------------------------------------------- #
# Full forward
# --------------------------------------------------------------------------- #
def attention_forward(x, params, *, heads, dim_head, eps=1e-5,
                      q_tile=256, kv_tile=128, head_group=4, row_tile=256,
                      compute_dtype=None, vmem_limit_bytes=48 * 1024 * 1024):
    """Fused LayerNorm -> MHSA -> output projection (dropout=0 -> identity).

    params = (gamma, beta, w_qkv, w_out, b_out) with x@W layout:
      gamma, beta: (D,); w_qkv: (D, 3*heads*dim_head);
      w_out: (heads*dim_head, D); b_out: (D,)
    """
    B, N, D = x.shape
    inner = heads * dim_head
    scale = dim_head ** (-0.5)
    if compute_dtype is None:
        compute_dtype = x.dtype
    compute_dtype = jnp.dtype(compute_dtype)
    out_dtype = x.dtype

    gamma, beta, w_qkv, w_out, b_out = params

    # Fold the softmax scale into the Q columns of the fused QKV weight (zero kernel cost).
    w_qkv_s = jnp.concatenate(
        [w_qkv[:, :inner] * scale, w_qkv[:, inner:]], axis=-1).astype(compute_dtype)
    gamma2 = gamma.reshape(1, D)
    beta2 = beta.reshape(1, D)
    w_out_c = w_out.astype(compute_dtype)
    b_out2 = b_out.reshape(1, D)

    # Pad the sequence so it tiles cleanly (e.g. ViT's N=197); padded keys are
    # masked inside the attention kernel, padded rows are sliced off at the end.
    n_pad = _round_up(N, 8) if N <= 128 else _round_up(N, 128)
    if n_pad != N:
        x = jnp.pad(x, ((0, 0), (0, n_pad - N), (0, 0)))

    # ---- pass 1: LayerNorm + fused QKV projection ----
    x_rows = x.reshape(B * n_pad, D)
    qkv = _ln_qkv(x_rows, gamma2, beta2, w_qkv_s, eps=eps,
                  out_dtype=compute_dtype, row_tile=row_tile,
                  vmem_limit=vmem_limit_bytes)

    # Layout plumbing (cheap XLA copies, kept out of Mosaic): b n (3 h d) -> 3 b h n d
    qkv = qkv.reshape(B, n_pad, 3, heads, dim_head).transpose(2, 0, 3, 1, 4)
    q, k, v = qkv[0], qkv[1], qkv[2]                       # (B, H, n_pad, dh)

    # ---- pass 2: flash attention ----
    attn = _flash_attention(q, k, v, n_valid=N, q_tile=q_tile, kv_tile=kv_tile,
                            head_group=head_group, vmem_limit=vmem_limit_bytes)

    # Layout plumbing: b h n d -> (b n) (h d)
    attn_rows = attn.transpose(0, 2, 1, 3).reshape(B * n_pad, inner)

    # ---- pass 3: output projection ----
    out_rows = _out_proj(attn_rows, w_out_c, b_out2, out_dtype=out_dtype,
                         row_tile=row_tile, vmem_limit=vmem_limit_bytes)
    out = out_rows.reshape(B, n_pad, D)
    if n_pad != N:
        out = out[:, :N, :]
    return out


def reference_forward(x, params, *, heads, dim_head, eps=1e-5):
    """Plain-JAX reference mirroring the PyTorch module (dropout=0)."""
    gamma, beta, w_qkv, w_out, b_out = params
    B, N, D = x.shape
    inner = heads * dim_head
    mean = jnp.mean(x, axis=-1, keepdims=True)
    var = jnp.mean((x - mean) ** 2, axis=-1, keepdims=True)
    xn = (x - mean) / jnp.sqrt(var + eps) * gamma + beta
    qkv = xn @ w_qkv
    q, k, v = jnp.split(qkv, 3, axis=-1)

    def to_heads(t):
        return t.reshape(B, N, heads, dim_head).transpose(0, 2, 1, 3)

    q, k, v = map(to_heads, (q, k, v))
    dots = jnp.einsum("bhnd,bhmd->bhnm", q, k) * (dim_head ** -0.5)
    attn = jax.nn.softmax(dots, axis=-1)
    out = jnp.einsum("bhnm,bhmd->bhnd", attn, v)
    out = out.transpose(0, 2, 1, 3).reshape(B, N, inner)
    return out @ w_out + b_out


if __name__ == "__main__":
    # Small shapes consistent with the module's forward.
    B, N, D = 2, 8, 32
    heads, dim_head = 4, 16
    inner = heads * dim_head

    key = jax.random.PRNGKey(0)
    kx, kq, ko, kb, kg, kbt = jax.random.split(key, 6)

    x = jax.random.normal(kx, (B, N, D), dtype=jnp.float32)
    gamma = 1.0 + 0.1 * jax.random.normal(kg, (D,), dtype=jnp.float32)
    beta = 0.05 * jax.random.normal(kbt, (D,), dtype=jnp.float32)
    w_qkv = 0.05 * jax.random.normal(kq, (D, 3 * inner), dtype=jnp.float32)
    w_out = 0.05 * jax.random.normal(ko, (inner, D), dtype=jnp.float32)
    b_out = 0.01 * jax.random.normal(kb, (D,), dtype=jnp.float32)
    params = (gamma, beta, w_qkv, w_out, b_out)

    ref = reference_forward(x, params, heads=heads, dim_head=dim_head)

    # f32 matmul path (tolerance slightly loosened for the approx reciprocal).
    out = attention_forward(x, params, heads=heads, dim_head=dim_head)
    out = jax.block_until_ready(out)
    assert out.shape == (B, N, D)
    assert jnp.allclose(out, ref, atol=2e-3, rtol=2e-3), "f32 mismatch vs reference"

    # bf16 MXU fast path (f32 LayerNorm, softmax statistics and accumulation).
    out_bf16 = attention_forward(x, params, heads=heads, dim_head=dim_head,
                                 compute_dtype=jnp.bfloat16)
    out_bf16 = jax.block_until_ready(out_bf16)
    assert jnp.allclose(out_bf16, ref, atol=1e-1, rtol=1e-1), "bf16 mismatch vs reference"

    # Non-multiple-of-8 sequence: exercises padding + key masking + multi-tile
    # online softmax (small tiles force several q/kv grid steps).
    B2, N2, D2, h2, dh2 = 1, 12, 32, 2, 16
    k2 = jax.random.PRNGKey(1)
    ka, kb2, kc, kd, ke, kf = jax.random.split(k2, 6)
    x2 = jax.random.normal(ka, (B2, N2, D2), dtype=jnp.float32)
    params2 = (
        1.0 + 0.1 * jax.random.normal(kb2, (D2,), dtype=jnp.float32),
        0.05 * jax.random.normal(kc, (D2,), dtype=jnp.float32),
        0.05 * jax.random.normal(kd, (D2, 3 * h2 * dh2), dtype=jnp.float32),
        0.05 * jax.random.normal(ke, (h2 * dh2, D2), dtype=jnp.float32),
        0.01 * jax.random.normal(kf, (D2,), dtype=jnp.float32),
    )
    ref2 = reference_forward(x2, params2, heads=h2, dim_head=dh2)
    out2 = attention_forward(x2, params2, heads=h2, dim_head=dh2,
                             q_tile=8, kv_tile=8)
    out2 = jax.block_until_ready(out2)
    assert out2.shape == (B2, N2, D2)
    assert jnp.allclose(out2, ref2, atol=2e-3, rtol=2e-3), "padded-N mismatch vs reference"

    print("KERNEL_OK")
</pallas_src>

<mosaic_0001>
module attributes {stable_mosaic.version = 11 : i64} {
  func.func @_ln_qkv_kernel(%arg0: i32, %arg1: memref<16x32xf32, #tpu.memory_space<vmem>>, %arg2: memref<1x32xf32, #tpu.memory_space<vmem>>, %arg3: memref<1x32xf32, #tpu.memory_space<vmem>>, %arg4: memref<32x192xf32, #tpu.memory_space<vmem>>, %arg5: memref<16x192xf32, #tpu.memory_space<vmem>>) attributes {dimension_semantics = [#tpu.dimension_semantics<parallel>], iteration_bounds = array<i64: 1>, scalar_prefetch = 0 : i64, scratch_operands = 0 : i64, tpu.core_type = #tpu.core_type<tc>, window_params = [{transform_indices = @transform_0, window_bounds = array<i64: 16, 32>}, {pipeline_mode = #tpu.pipeline_mode<synchronous>, transform_indices = @transform_1, window_bounds = array<i64: 1, 32>}, {pipeline_mode = #tpu.pipeline_mode<synchronous>, transform_indices = @transform_2, window_bounds = array<i64: 1, 32>}, {pipeline_mode = #tpu.pipeline_mode<synchronous>, transform_indices = @transform_3, window_bounds = array<i64: 32, 192>}, {transform_indices = @transform_4, window_bounds = array<i64: 16, 192>}]} {
    %c0 = arith.constant 0 : index
    %c0_0 = arith.constant 0 : index
    %0 = vector.load %arg1[%c0, %c0_0] : memref<16x32xf32, #tpu.memory_space<vmem>>, vector<16x32xf32>
    %cst = arith.constant dense<0.000000e+00> : vector<16xf32>
    %1 = vector.multi_reduction <add>, %0, %cst [1] : vector<16x32xf32> to vector<16xf32>
    %2 = vector.shape_cast %1 : vector<16xf32> to vector<16x1xf32>
    %cst_1 = arith.constant 3.200000e+01 : f32
    %3 = vector.broadcast %cst_1 : f32 to vector<16x1xf32>
    %4 = arith.divf %2, %3 : vector<16x1xf32>
    %5 = vector.broadcast %4 : vector<16x1xf32> to vector<16x32xf32>
    %6 = arith.subf %0, %5 : vector<16x32xf32>
    %7 = arith.mulf %6, %6 : vector<16x32xf32>
    %cst_2 = arith.constant dense<0.000000e+00> : vector<16xf32>
    %8 = vector.multi_reduction <add>, %7, %cst_2 [1] : vector<16x32xf32> to vector<16xf32>
    %9 = vector.shape_cast %8 : vector<16xf32> to vector<16x1xf32>
    %cst_3 = arith.constant 3.200000e+01 : f32
    %10 = vector.broadcast %cst_3 : f32 to vector<16x1xf32>
    %11 = arith.divf %9, %10 : vector<16x1xf32>
    %12 = vector.broadcast %4 : vector<16x1xf32> to vector<16x32xf32>
    %13 = arith.subf %0, %12 : vector<16x32xf32>
    %cst_4 = arith.constant 9.99999974E-6 : f32
    %14 = vector.broadcast %cst_4 : f32 to vector<16x1xf32>
    %15 = arith.addf %11, %14 : vector<16x1xf32>
    %16 = math.rsqrt %15 : vector<16x1xf32>
    %17 = vector.broadcast %16 : vector<16x1xf32> to vector<16x32xf32>
    %18 = arith.mulf %13, %17 : vector<16x32xf32>
    %c0_5 = arith.constant 0 : index
    %c0_6 = arith.constant 0 : index
    %19 = vector.load %arg2[%c0_5, %c0_6] : memref<1x32xf32, #tpu.memory_space<vmem>>, vector<1x32xf32>
    %20 = vector.broadcast %19 : vector<1x32xf32> to vector<16x32xf32>
    %21 = arith.mulf %18, %20 : vector<16x32xf32>
    %c0_7 = arith.constant 0 : index
    %c0_8 = arith.constant 0 : index
    %22 = vector.load %arg3[%c0_7, %c0_8] : memref<1x32xf32, #tpu.memory_space<vmem>>, vector<1x32xf32>
    %23 = vector.broadcast %22 : vector<1x32xf32> to vector<16x32xf32>
    %24 = arith.addf %21, %23 : vector<16x32xf32>
    %c0_9 = arith.constant 0 : index
    %c0_10 = arith.constant 0 : index
    %25 = vector.load %arg4[%c0_9, %c0_10] : memref<32x192xf32, #tpu.memory_space<vmem>>, vector<32x192xf32>
    %cst_11 = arith.constant dense<0.000000e+00> : vector<16x192xf32>
    %26 = tpu.matmul %24, %25, %cst_11 {dimension_numbers = #tpu.dot_dimension_numbers<[1], [0], [0], [1], [0, 0, 1, 1], [], []>} : vector<16x32xf32>, vector<32x192xf32>, vector<16x192xf32> -> vector<16x192xf32>
    %c0_12 = arith.constant 0 : index
    %c0_13 = arith.constant 0 : index
    %27 = vector.load %arg5[%c0_12, %c0_13] : memref<16x192xf32, #tpu.memory_space<vmem>>, vector<16x192xf32>
    tpu.vector_store %arg5[%c0_12, %c0_13], %26 {strides = array<i32>} : memref<16x192xf32, #tpu.memory_space<vmem>>, vector<16x192xf32>,
    return
  }
  func.func @transform_0(%arg0: i32) -> (i32, i32) {
    %c0_i32 = arith.constant 0 : i32
    %c0_i32_0 = arith.constant 0 : i32
    return %arg0, %c0_i32 : i32, i32
  }
  func.func @transform_1(%arg0: i32) -> (i32, i32) {
    %c0_i32 = arith.constant 0 : i32
    %c0_i32_0 = arith.constant 0 : i32
    %c0_i32_1 = arith.constant 0 : i32
    return %c0_i32, %c0_i32_0 : i32, i32
  }
  func.func @transform_2(%arg0: i32) -> (i32, i32) {
    %c0_i32 = arith.constant 0 : i32
    %c0_i32_0 = arith.constant 0 : i32
    %c0_i32_1 = arith.constant 0 : i32
    return %c0_i32, %c0_i32_0 : i32, i32
  }
  func.func @transform_3(%arg0: i32) -> (i32, i32) {
    %c0_i32 = arith.constant 0 : i32
    %c0_i32_0 = arith.constant 0 : i32
    %c0_i32_1 = arith.constant 0 : i32
    return %c0_i32, %c0_i32_0 : i32, i32
  }
  func.func @transform_4(%arg0: i32) -> (i32, i32) {
    %c0_i32 = arith.constant 0 : i32
    %c0_i32_0 = arith.constant 0 : i32
    return %arg0, %c0_i32 : i32, i32
  }
}

</mosaic_0001>

<llo_original>
// kernel: tpu_custom_call.1
$region0: #{tpu_custom_call.1}
  #allocation0 [shape = 'u32[]', space=smem, size = 0x4, offset = 0x4, fixed_abs, tag = 'smem constant byte address 0x4 - core index']
  #allocation1 [shape = 'u32[144,128]{1,0:T(1,128)}', space=vmem, size = 0x12000, scoped, tag = 'internal scratch']
  %s0 = inlined_call_operand.hbm [shape: f32[16,32], index: 0, kind: input, shape index: {}]
  %s1 = inlined_call_operand.vmem [shape: f32[1,32], index: 1, kind: input, shape index: {}]
  %s2 = inlined_call_operand.vmem [shape: f32[1,32], index: 2, kind: input, shape index: {}]
  %s3 = inlined_call_operand.hbm [shape: f32[32,192], index: 3, kind: input, shape index: {}]
  %s4 = inlined_call_operand.hbm [shape: f32[16,192], index: 4, kind: output, shape index: {}]
  %s5 = sld [smem:[#allocation0]]
  $region34: #{tpu_custom_call.1} parent=0
    _
  %s7 = ssub.s32 1, %s5
  %s8 = scalar_select 0, %s7, %s5
  $region1: #{tpu_custom_call.1} parent=0
    #allocation2 [shape = 'u8[8192]{0}', space=vmem, size = 0x2000, scoped, tag = 'input window, operand 0, single buffered']
    #allocation3 [shape = 's32[1]{0}', space=sflag, size = 0x4, scoped, tag = 'scoped memory for tpu_custom_call.1']
    #allocation4 [shape = 's32[1]{0}', space=sflag, size = 0x4, scoped, tag = 'scoped memory for tpu_custom_call.1']
    #allocation5 [shape = 'u8[32768]{0}', space=vmem, size = 0x8000, scoped, tag = 'input window, operand 3, single buffered']
    #allocation6 [shape = 's32[1]{0}', space=sflag, size = 0x4, scoped, tag = 'scoped memory for tpu_custom_call.1']
    #allocation7 [shape = 'u8[16384]{0}', space=vmem, size = 0x4000, scoped, tag = 'output window, operand 0, single buffered']
    %9 = vsyncpa [#allocation3], 0
    %10 = vsyncpa [#allocation6], 0
    %11 = vsyncpa [#allocation4], 0
    // Predicated region
    $region2: #{tpu_custom_call.1} parent=1 // pred_check
      _
    $region3: #{tpu_custom_call.1} parent=1 // pred_check_branch
      %13 = sbr.rel (0) target = $region5
    $region4: #{tpu_custom_call.1} parent=1 // pred_region
      %s15 = ssub.s32 256, 256
      %16 = vsyncadd [#allocation3], %s15
      %s17 = sshll.u32 [#allocation2], 4
      %s18 = int_to_ptr.vmem [resolvable:$true] %s17
      %23 = dma.hbm_to_vmem [thread:$0]  %s0, 256, %s18, [#allocation3], 128, 128, 8
    $region5: #{tpu_custom_call.1} parent=1 // pred_fallthru
      _
    // Predicated region
    $region6: #{tpu_custom_call.1} parent=1 // pred_check
      _
    $region7: #{tpu_custom_call.1} parent=1 // pred_check_branch
      %25 = sbr.rel (0) target = $region9
    $region8: #{tpu_custom_call.1} parent=1 // pred_region
      _
    $region9: #{tpu_custom_call.1} parent=1 // pred_fallthru
      _
    // Predicated region
    $region10: #{tpu_custom_call.1} parent=1 // pred_check
      _
    $region11: #{tpu_custom_call.1} parent=1 // pred_check_branch
      %27 = sbr.rel (0) target = $region13
    $region12: #{tpu_custom_call.1} parent=1 // pred_region
      _
    $region13: #{tpu_custom_call.1} parent=1 // pred_fallthru
      _
    // Predicated region
    $region14: #{tpu_custom_call.1} parent=1 // pred_check
      _
    $region15: #{tpu_custom_call.1} parent=1 // pred_check_branch
      %29 = sbr.rel (0) target = $region17
    $region16: #{tpu_custom_call.1} parent=1 // pred_region
      %s31 = ssub.s32 1024, 1024
      %32 = vsyncadd [#allocation6], %s31
      %s33 = sshll.u32 [#allocation5], 4
      %s34 = int_to_ptr.vmem [resolvable:$true] %s33
      %39 = dma.hbm_to_vmem [thread:$0]  %s3, 1024, %s34, [#allocation6], 256, 256, 16
    $region17: #{tpu_custom_call.1} parent=1 // pred_fallthru
      _
    // Predicated region
    $region18: #{tpu_custom_call.1} parent=1 // pred_check
      _
    $region19: #{tpu_custom_call.1} parent=1 // pred_check_branch
      %41 = sbr.rel (0) target = $region21
    $region20: #{tpu_custom_call.1} parent=1 // pred_region
      %42 = dma.done [#allocation3], 256
    $region21: #{tpu_custom_call.1} parent=1 // pred_fallthru
      _
    // Predicated region
    $region22: #{tpu_custom_call.1} parent=1 // pred_check
      _
    $region23: #{tpu_custom_call.1} parent=1 // pred_check_branch
      %44 = sbr.rel (0) target = $region25
    $region24: #{tpu_custom_call.1} parent=1 // pred_region
      %45 = dma.done [#allocation6], 1024
    $region25: #{tpu_custom_call.1} parent=1 // pred_fallthru
      _
    %v46 = vld [vmem:[#allocation2] sm:$0xff]
    %v47 = vld [vmem:[#allocation2 + $0x8] sm:$0xff]
    %vm48 = vcmask 261120
    %v49 = vsel %vm48, %v46, 0.0
    %50 = vadd.xlane.f32.xlu0 %v49
    %v51 = vpop.xlane.xlu0 %50
    %v52 = vsel %vm48, %v47, 0.0
    %53 = vadd.xlane.f32.xlu0 %v52
    %v54 = vpop.xlane.xlu0 %53
    %v55 = vrcp.pop 32.0
    %v56 = vmul.f32 %v51, %v55
    %v57 = vmul.f32 %v54, %v55
    %v58 = vsub.f32 %v46, %v56
    %v59 = vsub.f32 %v47, %v57
    %v60 = vmul.f32 %v58, %v58
    %v61 = vmul.f32 %v59, %v59
    %v62 = vsel %vm48, %v60, 0.0
    %63 = vadd.xlane.f32.xlu0 %v62
    %v64 = vpop.xlane.xlu0 %63
    %v65 = vsel %vm48, %v61, 0.0
    %66 = vadd.xlane.f32.xlu0 %v65
    %v67 = vpop.xlane.xlu0 %66
    %v68 = vmul.f32 %v64, %v55
    %v69 = vmul.f32 %v67, %v55
    %v70 = vadd.f32 %v68, 1e-05
    %v71 = vadd.f32 %v69, 1e-05
    %v72 = vrsqrt.pop %v70
    %v73 = vrsqrt.pop %v71
    %v74 = vmul.f32 %v58, %v72
    %v75 = vmul.f32 %v59, %v73
    %v76 = vld [vmem:[%s1] sm:$0x1]
    %v78 = vlaneseq
    %v79 = vshrl.u32 %v78, 7
    %v80 = vsub.s32 0, %v79
    %v81 = vrot.slane %v76, %v80
    %v83 = vmul.f32 %v74, %v81
    %v84 = vmul.f32 %v75, %v81
    %v85 = vld [vmem:[%s2] sm:$0x1]
    %v87 = vlaneseq
    %v88 = vshrl.u32 %v87, 7
    %v89 = vsub.s32 0, %v88
    %v90 = vrot.slane %v85, %v89
    %v92 = vadd.f32 %v83, %v90
    %v93 = vadd.f32 %v84, %v90
    %v94 = vld [vmem:[#allocation5] sm:$0xff]
    %v95 = vld [vmem:[#allocation5 + $0x8] sm:$0xff]
    %v96 = vld [vmem:[#allocation5 + $0x10] sm:$0xff]
    %v97 = vld [vmem:[#allocation5 + $0x18] sm:$0xff]
    %v98 = vld [vmem:[#allocation5 + $0x20] sm:$0xff]
    %v99 = vld [vmem:[#allocation5 + $0x28] sm:$0xff]
    %v100 = vld [vmem:[#allocation5 + $0x30] sm:$0xff]
    %v101 = vld [vmem:[#allocation5 + $0x38] sm:$0xff]
    %v103 = vsel %vm48, %v92, 0
    %v106 = vsel %vm48, %v93, 0
    %108 = vmatprep.subr.mxu0 %v95
    %109 = vmatpush1.msra.mxu0 %v94
    %110 = vmatprep.subr.mxu0 %v97
    %111 = vmatpush1.msra.mxu0 %v96
    %112 = vmatprep.subr.mxu0 %v99
    %113 = vmatpush1.msra.mxu0 %v98
    %114 = vmatprep.subr.mxu0 %v101
    %115 = vmatpush1.msra.mxu0 %v100
    %116 = vmatprep.subr.mxu0 0.0
    %117 = vmatpush1.msra.mxu0 0.0
    %118 = vmatprep.subr.mxu0 0.0
    %119 = vmatpush1.msra.mxu0 0.0
    %120 = vmatprep.subr.mxu0 0.0
    %121 = vmatpush1.msra.mxu0 0.0
    %122 = vmatprep.subr.mxu0 0.0
    %123 = vmatpush1.msra.mxu0 0.0
    %124 = vmatprep.subr.mxu0 0.0
    %125 = vmatpush1.msra.mxu0 0.0
    %126 = vmatprep.subr.mxu0 0.0
    %127 = vmatpush1.msra.mxu0 0.0
    %128 = vmatprep.subr.mxu0 0.0
    %129 = vmatpush1.msra.mxu0 0.0
    %130 = vmatprep.subr.mxu0 0.0
    %131 = vmatpush1.msra.mxu0 0.0
    %132 = vmatprep.subr.mxu0 0.0
    %133 = vmatpush1.msra.mxu0 0.0
    %134 = vmatprep.subr.mxu0 0.0
    %135 = vmatpush1.msra.mxu0 0.0
    %136 = vmatprep.subr.mxu0 0.0
    %137 = vmatpush1.msra.mxu0 0.0
    %138 = vmatprep.subr.mxu0 0.0
    %139 = vmatpush1.msra.mxu0 0.0
    %140 = vmatprep.subr.mxu0 0.0
    %141 = vmatpush1.msra.mxu0 0.0
    %142 = vmatprep.subr.mxu0 0.0
    %143 = vmatpush1.msra.mxu0 0.0
    %144 = vmatprep.subr.mxu0 0.0
    %145 = vmatpush1.msra.mxu0 0.0
    %146 = vmatprep.subr.mxu0 0.0
    %147 = vmatpush1.msra.mxu0 0.0
    %148 = vmatprep.subr.mxu0 0.0
    %149 = vmatpush1.msra.mxu0 0.0
    %150 = vmatprep.subr.mxu0 0.0
    %151 = vmatpush1.msra.mxu0 0.0
    %152 = vmatprep.subr.mxu0 0.0
    %153 = vmatpush1.msra.mxu0 0.0
    %154 = vmatprep.subr.mxu0 0.0
    %155 = vmatpush1.msra.mxu0 0.0
    %156 = vmatprep.subr.mxu0 0.0
    %157 = vmatpush1.msra.mxu0 0.0
    %158 = vmatprep.subr.mxu0 0.0
    %159 = vmatpush1.msra.mxu0 0.0
    %160 = vmatprep.subr.mxu0 0.0
    %161 = vmatpush1.msra.mxu0 0.0
    %162 = vmatprep.subr.mxu0 0.0
    %163 = vmatpush1.msra.mxu0 0.0
    %164 = vmatprep.subr.mxu0 0.0
    %165 = vmatpush1.msra.mxu0 0.0
    %166 = vmatprep.subr.mxu0 0.0
    %167 = vmatpush1.msra.mxu0 0.0
    %168 = vmatprep.subr.mxu0 0.0
    %169 = vmatpush1.msra.mxu0 0.0
    %170 = vmatprep.subr.mxu0 0.0
    %171 = vmatpush1.msra.mxu0 0.0
    %172 = vmatprep.mubr.f32.mxu0 0.0
    %173 = vmatmul.mubr.f32.gmra.mrb[0].mxu0 %v103
    %v174 = vpop.f32.mrb[0].mxu0
    %v175 = vadd.f32 0.0, %v174
    %v176 = vpop.f32.mrb[0].mxu0
    %v177 = vadd.f32 0.0, %v176
    %178 = vmatprep.mubr.f32.mxu0 0.0
    %179 = vmatmul.mubr.f32.gmra.mrb[0].mxu0 %v106
    %v180 = vpop.f32.mrb[0].mxu0
    %v181 = vadd.f32 0.0, %v180
    %v182 = vpop.f32.mrb[0].mxu0
    %v183 = vadd.f32 0.0, %v182
    %184 = vdwg.mxu0
    %185 = vst [vmem:[#allocation7] sm:$0xff] %v175
    %vm186 = vcmask 523264
    %187 = vst.msk [vmem:[#allocation7 + $0x8] sm:$0xff] %vm186, %v177
    %188 = vst [vmem:[#allocation7 + $0x10] sm:$0xff] %v181
    %189 = vst.msk [vmem:[#allocation7 + $0x18] sm:$0xff] %vm186, %v183
    // Predicated region
    $region26: #{tpu_custom_call.1} parent=1 // pred_check
      _
    $region27: #{tpu_custom_call.1} parent=1 // pred_check_branch
      %191 = sbr.rel (0) target = $region29
    $region28: #{tpu_custom_call.1} parent=1 // pred_region
      %s193 = ssub.s32 512, 512
      %194 = vsyncadd [#allocation4], %s193
      %s195 = sshll.u32 [#allocation7], 4
      %s196 = int_to_ptr.vmem [resolvable:$true] %s195
      %201 = dma.vmem_to_hbm [thread:$0]  %s196, 512, %s4, [#allocation4], 256, 256, 16
    $region29: #{tpu_custom_call.1} parent=1 // pred_fallthru
      _
    // Predicated region
    $region30: #{tpu_custom_call.1} parent=1 // pred_check
      _
    $region31: #{tpu_custom_call.1} parent=1 // pred_check_branch
      %203 = sbr.rel (0) target = $region33
    $region32: #{tpu_custom_call.1} parent=1 // pred_region
      %204 = dma.done [#allocation4], 512
    $region33: #{tpu_custom_call.1} parent=1 // pred_fallthru
      _
    %205 = vsyncpa [#allocation3], 1
    %206 = vsyncpa [#allocation6], 1
    %207 = vsyncpa [#allocation4], 1

</llo_original>
